<compile_context>
chip_gen: v7x
topology: tpu7x:2x2x1
jax: 0.10.0
libtpu: 0.0.40
codegen_flags: <defaults>
</compile_context>

<pallas_src>
import math

import jax
import jax.numpy as jnp
from jax.experimental import pallas as pl
from jax.experimental.pallas import tpu as pltpu


def _ffn_kernel(x_ref, w1a_ref, w1b_ref, w2_ref, o_ref, acc_ref):
    # x_ref:   (tm, d_model)   resident across the d_ff (reduction) axis
    # w1a_ref: (d_model, tf)   W1.T columns [k*tf, (k+1)*tf)          -> x1
    # w1b_ref: (d_model, tf)   W1.T columns [d_ff + k*tf, ... + tf)   -> x2
    # w2_ref:  (tf, d_model)   W2.T rows    [k*tf, (k+1)*tf)
    # o_ref:   (tm, d_model)
    # acc_ref: (tm, d_model)   f32 accumulator (VMEM scratch)
    k = pl.program_id(1)

    x = x_ref[...]
    # Plain (M,K)@(K,N) contractions: K is second-minor on every RHS tile, so
    # Mosaic feeds the MXU directly (no vxpose in the vex slot).
    x1 = jnp.dot(x, w1a_ref[...], preferred_element_type=jnp.float32)
    x2 = jnp.dot(x, w1b_ref[...], preferred_element_type=jnp.float32)
    # SwiGLU epilogue: sigmoid -> EUP, muls -> VPU (hidden under MXU work).
    h = x1 * (x2 * jax.nn.sigmoid(x2))
    y = jnp.dot(h.astype(w2_ref.dtype), w2_ref[...],
                preferred_element_type=jnp.float32)

    # Fused accumulator init: no tm x d_model f32 zero-store + re-read on k==0.
    @pl.when(k == 0)
    def _():
        acc_ref[...] = y

    @pl.when(k > 0)
    def _():
        acc_ref[...] += y

    @pl.when(k == pl.num_programs(1) - 1)
    def _():
        o_ref[...] = acc_ref[...].astype(o_ref.dtype)


def _round_up(x, m):
    return (x + m - 1) // m * m


def _sublane(dtype):
    # Sublane packing: 8 rows for 32-bit, 16 for 16-bit, 32 for 8-bit dtypes.
    return max(8, 32 // jnp.dtype(dtype).itemsize)


def _vmem_estimate(tm, tf, d_model, a_bytes, w_bytes):
    """VMEM bytes needed by the pipeline + kernel body for a (tm, tf) tiling."""
    return (
        2 * tm * d_model * a_bytes          # x blocks (double-buffered)
        + 2 * 3 * d_model * tf * w_bytes    # w1a / w1b / w2 blocks (double-buffered)
        + 2 * tm * d_model * a_bytes        # output blocks (double-buffered)
        + tm * d_model * 4                  # f32 accumulator scratch
        + tm * tf * (3 * 4 + w_bytes)       # x1 / x2 / h (f32) + h cast to w dtype
    )


def _select_tiles(M, d_model, d_ff, a_bytes, w_bytes, budget, sub_m,
                  tm_max, tf_max):
    """Pick (tm, tf): maximise tm first (weight re-streaming ~ 1/tm), then tf."""
    # Prefer tf >= 256 so streamed RHS tiles fill the 256-wide MXU; fall back
    # to 128 / full d_ff for small hidden sizes.
    tf_cands = [t for t in (1024, 512, 256)
                if t <= tf_max and t <= d_ff and d_ff % t == 0]
    if not tf_cands:
        tf_cands = ([128] if (128 <= tf_max and 128 <= d_ff and d_ff % 128 == 0)
                    else [d_ff])

    # Divisors of M first (no host-side activation padding).
    tm_cands = [t for t in (4096, 2048, 1024, 512, 256, 128)
                if t <= tm_max and t <= M and M % t == 0]
    if not tm_cands:
        # Small or ragged M: sublane-aligned tiles (may require padding M).
        m_aligned = _round_up(M, sub_m)
        tm_cands = sorted({min(m_aligned, max(t, sub_m))
                           for t in (2048, 1024, 512, 256, 128, 64, 32, 16, 8)
                           if t <= tm_max}, reverse=True) or [m_aligned]

    for tm in tm_cands:
        for tf in tf_cands:
            if _vmem_estimate(tm, tf, d_model, a_bytes, w_bytes) <= budget:
                return tm, tf
    return tm_cands[-1], tf_cands[-1]


def positionwise_feed_forward(x, w1, w2, *, tm_max=2048, tf_max=1024):
    """SwiGLU FFN forward (eval mode).

    x:  (B, S, d_model)
    w1: (2*d_ff, d_model)   -- nn.Linear(d_model, 2*d_ff, bias=False).weight
    w2: (d_model, d_ff)     -- nn.Linear(d_ff, d_model, bias=False).weight
    """
    B, S, d_model = x.shape
    two_dff, d_model_w = w1.shape
    assert d_model_w == d_model
    d_ff = two_dff // 2
    assert w2.shape == (d_model, d_ff)

    M = B * S
    x2d = x.reshape(M, d_model)

    # One-time layout change so every RHS tile is MXU-native (K second-minor).
    w1t = w1.T            # (d_model, 2*d_ff)
    w2t = w2.T            # (d_ff, d_model)

    a_bytes = jnp.dtype(x.dtype).itemsize
    w_bytes = jnp.dtype(w1.dtype).itemsize
    sub_m = _sublane(x.dtype)

    # ---- generation-aware tile selection (VMEM capacity from the chip) -----
    try:
        vmem_cap = int(pltpu.get_tpu_info().vmem_capacity_bytes)
    except Exception:
        vmem_cap = 64 << 20           # conservative (v7x-sized) fallback
    budget = int(0.8 * vmem_cap)      # headroom for Mosaic internal scratch
    tm, tf = _select_tiles(M, d_model, d_ff, a_bytes, w_bytes, budget,
                           sub_m, tm_max, tf_max)

    m_pad = _round_up(M, tm)
    if m_pad != M:
        # Fallback only: tm is picked from divisors of M whenever possible so
        # this O(M*d_model) HBM round trip is normally skipped.
        x2d = jnp.pad(x2d, ((0, m_pad - M), (0, 0)))
    n_m = m_pad // tm
    n_k = d_ff // tf            # tf divides d_ff (or equals it) by construction

    needed = _vmem_estimate(tm, tf, d_model, a_bytes, w_bytes)
    vmem_limit = int(min(vmem_cap, max(needed * 1.25 + (4 << 20), 32 << 20)))

    cost = pl.CostEstimate(
        flops=6 * m_pad * d_model * d_ff,
        transcendentals=m_pad * d_ff,
        bytes_accessed=(
            m_pad * d_model * a_bytes                    # x read once
            + n_m * (w1.size + w2.size) * w_bytes        # weights streamed per M tile
            + m_pad * d_model * a_bytes),                # output written once
    )

    out = pl.pallas_call(
        _ffn_kernel,
        out_shape=jax.ShapeDtypeStruct((m_pad, d_model), x.dtype),
        grid_spec=pltpu.PrefetchScalarGridSpec(
            num_scalar_prefetch=0,
            grid=(n_m, n_k),                       # reduction (d_ff) axis last
            in_specs=[
                pl.BlockSpec((tm, d_model), lambda i, k: (i, 0)),
                pl.BlockSpec((d_model, tf), lambda i, k: (0, k)),
                pl.BlockSpec((d_model, tf), lambda i, k, nk=n_k: (0, nk + k)),
                pl.BlockSpec((tf, d_model), lambda i, k: (k, 0)),
            ],
            out_specs=pl.BlockSpec((tm, d_model), lambda i, k: (i, 0)),
            scratch_shapes=[pltpu.VMEM((tm, d_model), jnp.float32)],
        ),
        compiler_params=pltpu.CompilerParams(
            dimension_semantics=("parallel", "arbitrary"),
            vmem_limit_bytes=vmem_limit,
        ),
        cost_estimate=cost,
    )(x2d, w1t, w1t, w2t)     # w1t passed twice: two column-halves via index_map

    # TODO(synk): dropout omitted -- nn.Dropout is identity in eval mode; a
    # training-mode variant would use pltpu.prng_seed / prng_random_bits.
    # TODO(synk): when n_m == 1 on dual-TensorCore parts (v7x), split the d_ff
    # reduction across cores (two partial accumulators + final add) so both
    # TensorCores are busy for decode-shaped calls.
    return out[:M].reshape(B, S, d_model)


def _reference(x, w1, w2):
    h = jnp.einsum("bsd,fd->bsf", x, w1)
    d_ff = w1.shape[0] // 2
    x1, x2 = h[..., :d_ff], h[..., d_ff:]
    h = x1 * (x2 * jax.nn.sigmoid(x2))
    return jnp.einsum("bsf,df->bsd", h, w2)


if __name__ == "__main__":
    d_model, d_ff = 128, 256
    B, S = 2, 16

    key = jax.random.PRNGKey(0)
    kx, k1, k2 = jax.random.split(key, 3)

    x = jax.random.normal(kx, (B, S, d_model), dtype=jnp.float32)
    # Deterministic init mimicking nn.Linear's uniform(-1/sqrt(fan_in), ...).
    w1 = jax.random.uniform(k1, (2 * d_ff, d_model), dtype=jnp.float32,
                            minval=-1.0 / math.sqrt(d_model),
                            maxval=1.0 / math.sqrt(d_model))
    w2 = jax.random.uniform(k2, (d_model, d_ff), dtype=jnp.float32,
                            minval=-1.0 / math.sqrt(d_ff),
                            maxval=1.0 / math.sqrt(d_ff))

    # tf_max=128 so the small test exercises the multi-step d_ff reduction and
    # the fused-init accumulator path (grid = (1, 2)).
    y = positionwise_feed_forward(x, w1, w2, tf_max=128)
    jax.block_until_ready(y)

    y_ref = _reference(x, w1, w2)
    assert y.shape == (B, S, d_model)
    err = float(jnp.max(jnp.abs(y - y_ref)))
    assert jnp.allclose(y, y_ref, atol=1e-4, rtol=1e-4), err

    print("KERNEL_OK")
</pallas_src>

<mosaic_0001>
module attributes {stable_mosaic.version = 11 : i64} {
  func.func @_ffn_kernel(%arg0: i32, %arg1: i32, %arg2: memref<32x128xf32, #tpu.memory_space<vmem>>, %arg3: memref<128x128xf32, #tpu.memory_space<vmem>>, %arg4: memref<128x128xf32, #tpu.memory_space<vmem>>, %arg5: memref<128x128xf32, #tpu.memory_space<vmem>>, %arg6: memref<32x128xf32, #tpu.memory_space<vmem>>, %arg7: memref<32x128xf32, #tpu.memory_space<vmem>>) attributes {dimension_semantics = [#tpu.dimension_semantics<parallel>, #tpu.dimension_semantics<arbitrary>], iteration_bounds = array<i64: 1, 2>, scalar_prefetch = 0 : i64, scratch_operands = 1 : i64, tpu.core_type = #tpu.core_type<tc>, window_params = [{transform_indices = @transform_0, window_bounds = array<i64: 32, 128>}, {transform_indices = @transform_1, window_bounds = array<i64: 128, 128>}, {transform_indices = @transform_2, window_bounds = array<i64: 128, 128>}, {transform_indices = @transform_3, window_bounds = array<i64: 128, 128>}, {transform_indices = @transform_4, window_bounds = array<i64: 32, 128>}]} {
    %c0 = arith.constant 0 : index
    %c0_0 = arith.constant 0 : index
    %0 = vector.load %arg2[%c0, %c0_0] : memref<32x128xf32, #tpu.memory_space<vmem>>, vector<32x128xf32>
    %c0_1 = arith.constant 0 : index
    %c0_2 = arith.constant 0 : index
    %1 = vector.load %arg3[%c0_1, %c0_2] : memref<128x128xf32, #tpu.memory_space<vmem>>, vector<128x128xf32>
    %cst = arith.constant dense<0.000000e+00> : vector<32x128xf32>
    %2 = tpu.matmul %0, %1, %cst {dimension_numbers = #tpu.dot_dimension_numbers<[1], [0], [0], [1], [0, 0, 1, 1], [], []>} : vector<32x128xf32>, vector<128x128xf32>, vector<32x128xf32> -> vector<32x128xf32>
    %c0_3 = arith.constant 0 : index
    %c0_4 = arith.constant 0 : index
    %3 = vector.load %arg4[%c0_3, %c0_4] : memref<128x128xf32, #tpu.memory_space<vmem>>, vector<128x128xf32>
    %cst_5 = arith.constant dense<0.000000e+00> : vector<32x128xf32>
    %4 = tpu.matmul %0, %3, %cst_5 {dimension_numbers = #tpu.dot_dimension_numbers<[1], [0], [0], [1], [0, 0, 1, 1], [], []>} : vector<32x128xf32>, vector<128x128xf32>, vector<32x128xf32> -> vector<32x128xf32>
    %5 = arith.negf %4 : vector<32x128xf32>
    %6 = math.exp %5 : vector<32x128xf32>
    %cst_6 = arith.constant 1.000000e+00 : f32
    %7 = vector.broadcast %cst_6 : f32 to vector<32x128xf32>
    %8 = arith.addf %7, %6 : vector<32x128xf32>
    %9 = arith.divf %7, %8 : vector<32x128xf32>
    %10 = arith.mulf %4, %9 : vector<32x128xf32>
    %11 = arith.mulf %2, %10 : vector<32x128xf32>
    %c0_7 = arith.constant 0 : index
    %c0_8 = arith.constant 0 : index
    %12 = vector.load %arg5[%c0_7, %c0_8] : memref<128x128xf32, #tpu.memory_space<vmem>>, vector<128x128xf32>
    %cst_9 = arith.constant dense<0.000000e+00> : vector<32x128xf32>
    %13 = tpu.matmul %11, %12, %cst_9 {dimension_numbers = #tpu.dot_dimension_numbers<[1], [0], [0], [1], [0, 0, 1, 1], [], []>} : vector<32x128xf32>, vector<128x128xf32>, vector<32x128xf32> -> vector<32x128xf32>
    %c0_i32 = arith.constant 0 : i32
    %14 = arith.cmpi eq, %arg1, %c0_i32 : i32
    %15 = arith.extui %14 : i1 to i32
    %c0_i32_10 = arith.constant 0 : i32
    %16 = arith.cmpi ne, %15, %c0_i32_10 : i32
    scf.if %16 {
      %c0_14 = arith.constant 0 : index
      %c0_15 = arith.constant 0 : index
      %23 = vector.load %arg7[%c0_14, %c0_15] : memref<32x128xf32, #tpu.memory_space<vmem>>, vector<32x128xf32>
      tpu.vector_store %arg7[%c0_14, %c0_15], %13 {strides = array<i32>} : memref<32x128xf32, #tpu.memory_space<vmem>>, vector<32x128xf32>,
    } else {
    }
    %c0_i32_11 = arith.constant 0 : i32
    %17 = arith.cmpi sgt, %arg1, %c0_i32_11 : i32
    %18 = arith.extui %17 : i1 to i32
    %c0_i32_12 = arith.constant 0 : i32
    %19 = arith.cmpi ne, %18, %c0_i32_12 : i32
    scf.if %19 {
      %c0_14 = arith.constant 0 : index
      %c0_15 = arith.constant 0 : index
      %23 = vector.load %arg7[%c0_14, %c0_15] : memref<32x128xf32, #tpu.memory_space<vmem>>, vector<32x128xf32>
      %24 = arith.addf %23, %13 : vector<32x128xf32>
      %c0_16 = arith.constant 0 : index
      %c0_17 = arith.constant 0 : index
      %25 = vector.load %arg7[%c0_16, %c0_17] : memref<32x128xf32, #tpu.memory_space<vmem>>, vector<32x128xf32>
      tpu.vector_store %arg7[%c0_16, %c0_17], %24 {strides = array<i32>} : memref<32x128xf32, #tpu.memory_space<vmem>>, vector<32x128xf32>,
    } else {
    }
    %c1_i32 = arith.constant 1 : i32
    %20 = arith.cmpi eq, %arg1, %c1_i32 : i32
    %21 = arith.extui %20 : i1 to i32
    %c0_i32_13 = arith.constant 0 : i32
    %22 = arith.cmpi ne, %21, %c0_i32_13 : i32
    scf.if %22 {
      %c0_14 = arith.constant 0 : index
      %c0_15 = arith.constant 0 : index
      %23 = vector.load %arg7[%c0_14, %c0_15] : memref<32x128xf32, #tpu.memory_space<vmem>>, vector<32x128xf32>
      %c0_16 = arith.constant 0 : index
      %c0_17 = arith.constant 0 : index
      %24 = vector.load %arg6[%c0_16, %c0_17] : memref<32x128xf32, #tpu.memory_space<vmem>>, vector<32x128xf32>
      tpu.vector_store %arg6[%c0_16, %c0_17], %23 {strides = array<i32>} : memref<32x128xf32, #tpu.memory_space<vmem>>, vector<32x128xf32>,
    } else {
    }
    return
  }
  func.func @transform_0(%arg0: i32, %arg1: i32) -> (i32, i32) {
    %c0_i32 = arith.constant 0 : i32
    %c0_i32_0 = arith.constant 0 : i32
    return %arg0, %c0_i32 : i32, i32
  }
  func.func @transform_1(%arg0: i32, %arg1: i32) -> (i32, i32) {
    %c0_i32 = arith.constant 0 : i32
    %c0_i32_0 = arith.constant 0 : i32
    return %c0_i32, %arg1 : i32, i32
  }
  func.func @transform_2(%arg0: i32, %arg1: i32) -> (i32, i32) {
    %c2_i32 = arith.constant 2 : i32
    %0 = arith.addi %c2_i32, %arg1 : i32
    %c0_i32 = arith.constant 0 : i32
    %c0_i32_0 = arith.constant 0 : i32
    return %c0_i32, %0 : i32, i32
  }
  func.func @transform_3(%arg0: i32, %arg1: i32) -> (i32, i32) {
    %c0_i32 = arith.constant 0 : i32
    %c0_i32_0 = arith.constant 0 : i32
    return %arg1, %c0_i32 : i32, i32
  }
  func.func @transform_4(%arg0: i32, %arg1: i32) -> (i32, i32) {
    %c0_i32 = arith.constant 0 : i32
    %c0_i32_0 = arith.constant 0 : i32
    return %arg0, %c0_i32 : i32, i32
  }
}

</mosaic_0001>

<llo_original>
// kernel: tpu_custom_call.1
$region0: #{tpu_custom_call.1}
  #allocation0 [shape = 'u32[]', space=smem, size = 0x4, offset = 0x4, fixed_abs, tag = 'smem constant byte address 0x4 - core index']
  #allocation1 [shape = 'u32[144,128]{1,0:T(1,128)}', space=vmem, size = 0x12000, scoped, tag = 'internal scratch']
  #allocation2 [shape = 'f32[32,128]{1,0:T(8,128)}', space=vmem, size = 0x4000, scoped, tag = 'scratch operand']
  %s0 = inlined_call_operand.hbm [shape: f32[32,128], index: 0, kind: input, shape index: {}]
  %s1 = inlined_call_operand.hbm [shape: f32[128,512], index: 1, kind: input, shape index: {}]
  %s2 = inlined_call_operand.hbm [shape: f32[128,512], index: 2, kind: input, shape index: {}]
  %s3 = inlined_call_operand.hbm [shape: f32[256,128], index: 3, kind: input, shape index: {}]
  %s4 = inlined_call_operand.hbm [shape: f32[32,128], index: 4, kind: output, shape index: {}]
  %s5 = sld [smem:[#allocation0]]
  $region77: #{tpu_custom_call.1} parent=0
    _
  %s7 = ssub.s32 1, %s5
  %s8 = scalar_select 0, %s7, %s5
  $region1: #{tpu_custom_call.1} parent=0
    #allocation3 [shape = 'u8[16384]{0}', space=vmem, size = 0x4000, scoped, tag = 'input window, operand 0, single buffered']
    #allocation4 [shape = 's32[2]{0}', space=sflag, size = 0x8, scoped, tag = 'scoped memory for tpu_custom_call.1']
    #allocation5 [shape = 's32[2]{0}', space=sflag, size = 0x8, scoped, tag = 'scoped memory for tpu_custom_call.1']
    #allocation6 [shape = 'u8[131072]{0}', space=vmem, size = 0x20000, scoped, tag = 'input window, operand 1']
    #allocation7 [shape = 's32[2]{0}', space=sflag, size = 0x8, scoped, tag = 'scoped memory for tpu_custom_call.1']
    #allocation8 [shape = 'u8[131072]{0}', space=vmem, size = 0x20000, scoped, tag = 'input window, operand 2']
    #allocation9 [shape = 'u8[131072]{0}', space=vmem, size = 0x20000, scoped, tag = 'input window, operand 3']
    #allocation10 [shape = 's32[2]{0}', space=sflag, size = 0x8, scoped, tag = 'scoped memory for tpu_custom_call.1']
    #allocation11 [shape = 'u8[16384]{0}', space=vmem, size = 0x4000, scoped, tag = 'output window, operand 0, single buffered']
    %9 = vsyncpa [#allocation4], 0
    %10 = vsyncpa [#allocation7], 0
    %s11 = scalar_lea.sflag [#allocation7], 1
    %12 = vsyncpa %s11, 0
    %13 = vsyncpa [#allocation10], 0
    %s14 = scalar_lea.sflag [#allocation10], 1
    %15 = vsyncpa %s14, 0
    %16 = vsyncpa [#allocation5], 0
    loop: start=0, step=1, limit=4
    $region2: #{tpu_custom_call.1} parent=1 // loop_pre_header
      _
    $region3: #{tpu_custom_call.1} parent=1 // loop_header
      %s18 = sphi 0, %s22
      %p19 = scmp.ge.s32.totalorder %s18, 4
      %s25 = sphi 0, %s37
      %s26 = sphi 0, %s33
      %s27 = sphi 0, %s25
      %s28 = sphi 0, %s26
      %s29 = sphi 0, %s27
      %s30 = sphi 0, %s28
      %s40 = sphi 0, %s42
      %s43 = sphi 0, %s40
      %s44 = sphi 0, %s43
      %s60 = sphi 0, %s44
      %s66 = sphi 0, %s68
      %s69 = sphi 0, %s66
      %s70 = sphi 0, %s69
      %s86 = sphi 0, %s70
      %s94 = sphi 0, %s96
      %s97 = sphi 0, %s94
      %s98 = sphi 0, %s97
      %s114 = sphi 0, %s98
      %s120 = sphi 0, %s122
      %s123 = sphi 0, %s120
      %s124 = sphi 0, %s123
      %s140 = sphi 0, %s124
      %s146 = sphi 0, %s148
      %s149 = sphi 0, %s146
      %s150 = sphi 0, %s149
      %s166 = sphi 0, %s150
    $region4: #{tpu_custom_call.1} parent=1 // loop_header_branch
      %21 = sbr.rel (%p19) target = $region8
    $region5: #{tpu_custom_call.1} parent=1 // loop_body
      %s23 = ssub.s32 %s18, 1
      %s24 = ssub.s32 %s18, 2
      %s31 = sadd.s32 1, %s26
      %p32 = scmp.ge.s32.totalorder %s31, 2
      %s33 = scalar_select %p32, 0, %s31
      %s34 = sadd.s32 1, %s25
      %s35 = scalar_select %p32, %s34, %s25
      %p36 = scmp.ge.s32.totalorder %s35, 1
      %s37 = scalar_select %p36, 0, %s35
      %s38 = ssub.s32 %s25, %s37
      %p39 = scmp.eq.s32.totalorder %s38, 0
      %s41 = sadd.s32 %s40, 1
      %s42 = scalar_select %p39, %s40, %s41
      %p45 = pneg %p39
      %p46 = scmp.eq.s32.totalorder %s18, 1
      %p47 = por %p45, %p46
      %p48 = scmp.ne.s32.totalorder %s40, %s43
      %p49 = scmp.eq.s32.totalorder %s18, 0
      %p50 = por %p48, %p49
      %p51 = scmp.ne.s32.totalorder %s40, %s43
      %p52 = scmp.eq.s32.totalorder %s23, 1
      %p53 = por %p51, %p52
      %p54 = scmp.ne.s32.totalorder %s43, %s44
      %p55 = scmp.eq.s32.totalorder %s23, 0
      %p56 = por %p54, %p55
      %p57 = scmp.ne.s32.totalorder %s43, %s44
      %p58 = scmp.eq.s32.totalorder %s24, 1
      %p59 = por %p57, %p58
      %p61 = scmp.ne.s32.totalorder %s44, %s60
      %p62 = scmp.eq.s32.totalorder %s24, 0
      %p63 = por %p61, %p62
      %s64 = ssub.s32 %s26, %s33
      %p65 = scmp.eq.s32.totalorder %s64, 0
      %s67 = sadd.s32 %s66, 1
      %s68 = scalar_select %p65, %s66, %s67
      %p71 = pneg %p65
      %p72 = scmp.eq.s32.totalorder %s18, 1
      %p73 = por %p71, %p72
      %p74 = scmp.ne.s32.totalorder %s66, %s69
      %p75 = scmp.eq.s32.totalorder %s18, 0
      %p76 = por %p74, %p75
      %p77 = scmp.ne.s32.totalorder %s66, %s69
      %p78 = scmp.eq.s32.totalorder %s23, 1
      %p79 = por %p77, %p78
      %p80 = scmp.ne.s32.totalorder %s69, %s70
      %p81 = scmp.eq.s32.totalorder %s23, 0
      %p82 = por %p80, %p81
      %p83 = scmp.ne.s32.totalorder %s69, %s70
      %p84 = scmp.eq.s32.totalorder %s24, 1
      %p85 = por %p83, %p84
      %p87 = scmp.ne.s32.totalorder %s70, %s86
      %p88 = scmp.eq.s32.totalorder %s24, 0
      %p89 = por %p87, %p88
      %s90 = sadd.s32 %s26, 2
      %s91 = sadd.s32 %s33, 2
      %s92 = ssub.s32 %s90, %s91
      %p93 = scmp.eq.s32.totalorder %s92, 0
      %s95 = sadd.s32 %s94, 1
      %s96 = scalar_select %p93, %s94, %s95
      %p99 = pneg %p93
      %p100 = scmp.eq.s32.totalorder %s18, 1
      %p101 = por %p99, %p100
      %p102 = scmp.ne.s32.totalorder %s94, %s97
      %p103 = scmp.eq.s32.totalorder %s18, 0
      %p104 = por %p102, %p103
      %p105 = scmp.ne.s32.totalorder %s94, %s97
      %p106 = scmp.eq.s32.totalorder %s23, 1
      %p107 = por %p105, %p106
      %p108 = scmp.ne.s32.totalorder %s97, %s98
      %p109 = scmp.eq.s32.totalorder %s23, 0
      %p110 = por %p108, %p109
      %p111 = scmp.ne.s32.totalorder %s97, %s98
      %p112 = scmp.eq.s32.totalorder %s24, 1
      %p113 = por %p111, %p112
      %p115 = scmp.ne.s32.totalorder %s98, %s114
      %p116 = scmp.eq.s32.totalorder %s24, 0
      %p117 = por %p115, %p116
      %s118 = ssub.s32 %s26, %s33
      %p119 = scmp.eq.s32.totalorder %s118, 0
      %s121 = sadd.s32 %s120, 1
      %s122 = scalar_select %p119, %s120, %s121
      %p125 = pneg %p119
      %p126 = scmp.eq.s32.totalorder %s18, 1
      %p127 = por %p125, %p126
      %p128 = scmp.ne.s32.totalorder %s120, %s123
      %p129 = scmp.eq.s32.totalorder %s18, 0
      %p130 = por %p128, %p129
      %p131 = scmp.ne.s32.totalorder %s120, %s123
      %p132 = scmp.eq.s32.totalorder %s23, 1
      %p133 = por %p131, %p132
      %p134 = scmp.ne.s32.totalorder %s123, %s124
      %p135 = scmp.eq.s32.totalorder %s23, 0
      %p136 = por %p134, %p135
      %p137 = scmp.ne.s32.totalorder %s123, %s124
      %p138 = scmp.eq.s32.totalorder %s24, 1
      %p139 = por %p137, %p138
      %p141 = scmp.ne.s32.totalorder %s124, %s140
      %p142 = scmp.eq.s32.totalorder %s24, 0
      %p143 = por %p141, %p142
      %s144 = ssub.s32 %s25, %s37
      %p145 = scmp.eq.s32.totalorder %s144, 0
      %s147 = sadd.s32 %s146, 1
      %s148 = scalar_select %p145, %s146, %s147
      %p151 = pneg %p145
      %p152 = scmp.eq.s32.totalorder %s18, 1
      %p153 = por %p151, %p152
      %p154 = scmp.ne.s32.totalorder %s146, %s149
      %p155 = scmp.eq.s32.totalorder %s18, 0
      %p156 = por %p154, %p155
      %p157 = scmp.ne.s32.totalorder %s146, %s149
      %p158 = scmp.eq.s32.totalorder %s23, 1
      %p159 = por %p157, %p158
      %p160 = scmp.ne.s32.totalorder %s149, %s150
      %p161 = scmp.eq.s32.totalorder %s23, 0
      %p162 = por %p160, %p161
      %p163 = scmp.ne.s32.totalorder %s149, %s150
      %p164 = scmp.eq.s32.totalorder %s24, 1
      %p165 = por %p163, %p164
      %p167 = scmp.ne.s32.totalorder %s150, %s166
      %p168 = scmp.eq.s32.totalorder %s24, 0
      %p169 = por %p167, %p168
      %p170 = scmp.le.s32.totalorder 1, %s18
      %p171 = scmp.lt.s32.totalorder %s18, 3
      %p172 = pnand %p170, %p171
      %p173 = pneg %p172
      // Predicated region
      $region9: #{tpu_custom_call.1} parent=5 // pred_check
        _
      $region10: #{tpu_custom_call.1} parent=5 // pred_check_branch
        %175 = sbr.rel (%p172) target = $region12
      $region11: #{tpu_custom_call.1} parent=5 // pred_region
        %s176 = ssub.s32 %s18, 1
        // Predicated region
        $region13: #{tpu_custom_call.1} parent=11 // pred_check
          %p177 = pneg %p56
        $region14: #{tpu_custom_call.1} parent=11 // pred_check_branch
          %179 = sbr.rel (%p177) target = $region16
        $region15: #{tpu_custom_call.1} parent=11 // pred_region
          %s180 = smul.u32 4, %s27
          %s182 = ssub.s32 512, 512
          %183 = vsyncadd [#allocation4], %s182
          %s184 = smul.addr %s180, 128
          %s185 = scalar_lea.hbm %s0, %s184
          %s186 = sshll.u32 [#allocation3], 4
          %s187 = int_to_ptr.vmem [resolvable:$true] %s186
          %192 = dma.hbm_to_vmem [thread:$0]  %s185, 512, %s187, [#allocation4], 128, 128, 8
        $region16: #{tpu_custom_call.1} parent=11 // pred_fallthru
          _
      $region12: #{tpu_custom_call.1} parent=5 // pred_fallthru
        _
      %p193 = scmp.lt.s32.totalorder %s18, 2
      // Predicated region
      $region17: #{tpu_custom_call.1} parent=5 // pred_check
        %p194 = pneg %p193
      $region18: #{tpu_custom_call.1} parent=5 // pred_check_branch
        %196 = sbr.rel (%p194) target = $region20
      $region19: #{tpu_custom_call.1} parent=5 // pred_region
        // Predicated region
        $region21: #{tpu_custom_call.1} parent=19 // pred_check
          %p197 = pneg %p76
        $region22: #{tpu_custom_call.1} parent=19 // pred_check_branch
          %199 = sbr.rel (%p197) target = $region24
        $region23: #{tpu_custom_call.1} parent=19 // pred_region
          %s200 = sand.u32 %s18, 1
          %s201 = scalar_lea.sflag [#allocation7], %s200
          %s202 = sand.u32 %s66, 1
          %s203 = smul.addr %s202, 128
          %s204 = scalar_lea.vmem [#allocation6], %s203
          %s206 = ssub.s32 2048, 2048
          %207 = vsyncadd %s201, %s206
          %s208 = smul.addr %s26, 128
          %s209 = scalar_lea.hbm %s1, %s208
          %s210 = sshll.u32 %s204, 4
          %s211 = int_to_ptr.vmem [resolvable:$true] %s210
          %216 = dma.hbm_to_vmem [thread:$0]  %s209, 2048, %s211, %s201, 512, 128, 8
        $region24: #{tpu_custom_call.1} parent=19 // pred_fallthru
          _
        // Predicated region
        $region25: #{tpu_custom_call.1} parent=19 // pred_check
          %p217 = pneg %p104
        $region26: #{tpu_custom_call.1} parent=19 // pred_check_branch
          %219 = sbr.rel (%p217) target = $region28
        $region27: #{tpu_custom_call.1} parent=19 // pred_region
          %s220 = sand.u32 %s18, 1
          %s221 = scalar_lea.sflag [#allocation7], %s220
          %s222 = sand.u32 %s94, 1
          %s223 = smul.addr %s222, 128
          %s224 = scalar_lea.vmem [#allocation8], %s223
          %s225 = sadd.s32 %s26, 2
          %s227 = ssub.s32 2048, 2048
          %228 = vsyncadd %s221, %s227
          %s229 = smul.addr %s225, 128
          %s230 = scalar_lea.hbm %s2, %s229
          %s231 = sshll.u32 %s224, 4
          %s232 = int_to_ptr.vmem [resolvable:$true] %s231
          %237 = dma.hbm_to_vmem [thread:$0]  %s230, 2048, %s232, %s221, 512, 128, 8
        $region28: #{tpu_custom_call.1} parent=19 // pred_fallthru
          _
        // Predicated region
        $region29: #{tpu_custom_call.1} parent=19 // pred_check
          %p238 = pneg %p130
        $region30: #{tpu_custom_call.1} parent=19 // pred_check_branch
          %240 = sbr.rel (%p238) target = $region32
        $region31: #{tpu_custom_call.1} parent=19 // pred_region
          %s241 = sand.u32 %s120, 1
          %s242 = scalar_lea.sflag [#allocation10], %s241
          %s243 = sand.u32 %s120, 1
          %s244 = smul.addr %s243, 128
          %s245 = scalar_lea.vmem [#allocation9], %s244
          %s246 = smul.u32 16, %s26
          %s248 = ssub.s32 2048, 2048
          %249 = vsyncadd %s242, %s248
          %s250 = smul.addr %s246, 128
          %s251 = scalar_lea.hbm %s3, %s250
          %s252 = sshll.u32 %s245, 4
          %s253 = int_to_ptr.vmem [resolvable:$true] %s252
          %258 = dma.hbm_to_vmem [thread:$0]  %s251, 2048, %s253, %s242, 128, 128, 8
        $region32: #{tpu_custom_call.1} parent=19 // pred_fallthru
          _
      $region20: #{tpu_custom_call.1} parent=5 // pred_fallthru
        _
      %p259 = scmp.le.s32.totalorder 1, %s18
      %p260 = scmp.lt.s32.totalorder %s18, 3
      %p261 = pnand %p259, %p260
      %p262 = pneg %p261
      // Predicated region
      $region33: #{tpu_custom_call.1} parent=5 // pred_check
        _
      $region34: #{tpu_custom_call.1} parent=5 // pred_check_branch
        %264 = sbr.rel (%p261) target = $region36
      $region35: #{tpu_custom_call.1} parent=5 // pred_region
        %s265 = ssub.s32 %s18, 1
        // Predicated region
        $region37: #{tpu_custom_call.1} parent=35 // pred_check
          %p266 = pneg %p56
        $region38: #{tpu_custom_call.1} parent=35 // pred_check_branch
          %268 = sbr.rel (%p266) target = $region40
        $region39: #{tpu_custom_call.1} parent=35 // pred_region
          %269 = dma.done [#allocation4], 512
        $region40: #{tpu_custom_call.1} parent=35 // pred_fallthru
          _
        %s270 = sand.u32 %s23, 1
        %s271 = scalar_lea.sflag [#allocation7], %s270
        %s272 = sand.u32 %s69, 1
        %s273 = smul.addr %s272, 128
        %s274 = scalar_lea.vmem [#allocation6], %s273
        // Predicated region
        $region41: #{tpu_custom_call.1} parent=35 // pred_check
          %p275 = pneg %p82
        $region42: #{tpu_custom_call.1} parent=35 // pred_check_branch
          %277 = sbr.rel (%p275) target = $region44
        $region43: #{tpu_custom_call.1} parent=35 // pred_region
          %278 = dma.done %s271, 2048
        $region44: #{tpu_custom_call.1} parent=35 // pred_fallthru
          _
        %s279 = sand.u32 %s23, 1
        %s280 = scalar_lea.sflag [#allocation7], %s279
        %s281 = sand.u32 %s97, 1
        %s282 = smul.addr %s281, 128
        %s283 = scalar_lea.vmem [#allocation8], %s282
        // Predicated region
        $region45: #{tpu_custom_call.1} parent=35 // pred_check
          %p284 = pneg %p110
        $region46: #{tpu_custom_call.1} parent=35 // pred_check_branch
          %286 = sbr.rel (%p284) target = $region48
        $region47: #{tpu_custom_call.1} parent=35 // pred_region
          %287 = dma.done %s280, 2048
        $region48: #{tpu_custom_call.1} parent=35 // pred_fallthru
          _
        %s288 = sand.u32 %s123, 1
        %s289 = scalar_lea.sflag [#allocation10], %s288
        %s290 = sand.u32 %s123, 1
        %s291 = smul.addr %s290, 128
        %s292 = scalar_lea.vmem [#allocation9], %s291
        // Predicated region
        $region49: #{tpu_custom_call.1} parent=35 // pred_check
          %p293 = pneg %p136
        $region50: #{tpu_custom_call.1} parent=35 // pred_check_branch
          %295 = sbr.rel (%p293) target = $region52
        $region51: #{tpu_custom_call.1} parent=35 // pred_region
          %296 = dma.done %s289, 2048
        $region52: #{tpu_custom_call.1} parent=35 // pred_fallthru
          _
        %p297 = pneg %p56
        %p298 = pneg %p53
        %s299 = sand.u32 %s23, 1
        %s300 = scalar_lea.sflag [#allocation7], %s299
        %s301 = sand.u32 %s69, 1
        %s302 = smul.addr %s301, 128
        %s303 = scalar_lea.vmem [#allocation6], %s302
        %p304 = pneg %p82
        %p305 = pneg %p79
        %s306 = sand.u32 %s23, 1
        %s307 = scalar_lea.sflag [#allocation7], %s306
        %s308 = sand.u32 %s97, 1
        %s309 = smul.addr %s308, 128
        %s310 = scalar_lea.vmem [#allocation8], %s309
        %p311 = pneg %p110
        %p312 = pneg %p107
        %s313 = sand.u32 %s123, 1
        %s314 = scalar_lea.sflag [#allocation10], %s313
        %s315 = sand.u32 %s123, 1
        %s316 = smul.addr %s315, 128
        %s317 = scalar_lea.vmem [#allocation9], %s316
        %p318 = pneg %p136
        %p319 = pneg %p133
        %p320 = pneg %p162
        %p321 = pneg %p159
        %s322 = smul.u32 4, %s27
        %s323 = sadd.s32 %s28, 2
        %s324 = smul.u32 16, %s28
        %s325 = smul.u32 4, %s27
        %v326 = vld [vmem:[#allocation3] sm:$0xff]
        %v327 = vld [vmem:[#allocation3 + $0x8] sm:$0xff]
        %v328 = vld [vmem:[#allocation3 + $0x10] sm:$0xff]
        %v329 = vld [vmem:[#allocation3 + $0x18] sm:$0xff]
        %v330 = vld [vmem:[%s274] sm:$0xff]
        %v331 = vld [vmem:[%s274 + $0x8] sm:$0xff]
        %v332 = vld [vmem:[%s274 + $0x10] sm:$0xff]
        %v333 = vld [vmem:[%s274 + $0x18] sm:$0xff]
        %v334 = vld [vmem:[%s274 + $0x20] sm:$0xff]
        %v335 = vld [vmem:[%s274 + $0x28] sm:$0xff]
        %v336 = vld [vmem:[%s274 + $0x30] sm:$0xff]
        %v337 = vld [vmem:[%s274 + $0x38] sm:$0xff]
        %v338 = vld [vmem:[%s274 + $0x40] sm:$0xff]
        %v339 = vld [vmem:[%s274 + $0x48] sm:$0xff]
        %v340 = vld [vmem:[%s274 + $0x50] sm:$0xff]
        %v341 = vld [vmem:[%s274 + $0x58] sm:$0xff]
        %v342 = vld [vmem:[%s274 + $0x60] sm:$0xff]
        %v343 = vld [vmem:[%s274 + $0x68] sm:$0xff]
        %v344 = vld [vmem:[%s274 + $0x70] sm:$0xff]
        %v345 = vld [vmem:[%s274 + $0x78] sm:$0xff]
        %346 = vmatprep.subr.mxu0 0.0
        %347 = vmatpush1.msra.mxu0 %v330
        %348 = vmatprep.subr.mxu0 0.0
        %349 = vmatpush1.msra.mxu0 %v331
        %350 = vmatprep.subr.mxu0 0.0
        %351 = vmatpush1.msra.mxu0 %v332
        %352 = vmatprep.subr.mxu0 0.0
        %353 = vmatpush1.msra.mxu0 %v333
        %354 = vmatprep.subr.mxu0 0.0
        %355 = vmatpush1.msra.mxu0 %v334
        %356 = vmatprep.subr.mxu0 0.0
        %357 = vmatpush1.msra.mxu0 %v335
        %358 = vmatprep.subr.mxu0 0.0
        %359 = vmatpush1.msra.mxu0 %v336
        %360 = vmatprep.subr.mxu0 0.0
        %361 = vmatpush1.msra.mxu0 %v337
        %362 = vmatprep.subr.mxu0 0.0
        %363 = vmatpush1.msra.mxu0 %v338
        %364 = vmatprep.subr.mxu0 0.0
        %365 = vmatpush1.msra.mxu0 %v339
        %366 = vmatprep.subr.mxu0 0.0
        %367 = vmatpush1.msra.mxu0 %v340
        %368 = vmatprep.subr.mxu0 0.0
        %369 = vmatpush1.msra.mxu0 %v341
        %370 = vmatprep.subr.mxu0 0.0
        %371 = vmatpush1.msra.mxu0 %v342
        %372 = vmatprep.subr.mxu0 0.0
        %373 = vmatpush1.msra.mxu0 %v343
        %374 = vmatprep.subr.mxu0 0.0
        %375 = vmatpush1.msra.mxu0 %v344
        %376 = vmatprep.subr.mxu0 0.0
        %377 = vmatpush1.msra.mxu0 %v345
        %378 = vmatprep.subr.mxu0 0.0
        %379 = vmatpush1.msra.mxu0 0.0
        %380 = vmatprep.subr.mxu0 0.0
        %381 = vmatpush1.msra.mxu0 0.0
        %382 = vmatprep.subr.mxu0 0.0
        %383 = vmatpush1.msra.mxu0 0.0
        %384 = vmatprep.subr.mxu0 0.0
        %385 = vmatpush1.msra.mxu0 0.0
        %386 = vmatprep.subr.mxu0 0.0
        %387 = vmatpush1.msra.mxu0 0.0
        %388 = vmatprep.subr.mxu0 0.0
        %389 = vmatpush1.msra.mxu0 0.0
        %390 = vmatprep.subr.mxu0 0.0
        %391 = vmatpush1.msra.mxu0 0.0
        %392 = vmatprep.subr.mxu0 0.0
        %393 = vmatpush1.msra.mxu0 0.0
        %394 = vmatprep.subr.mxu0 0.0
        %395 = vmatpush1.msra.mxu0 0.0
        %396 = vmatprep.subr.mxu0 0.0
        %397 = vmatpush1.msra.mxu0 0.0
        %398 = vmatprep.subr.mxu0 0.0
        %399 = vmatpush1.msra.mxu0 0.0
        %400 = vmatprep.subr.mxu0 0.0
        %401 = vmatpush1.msra.mxu0 0.0
        %402 = vmatprep.subr.mxu0 0.0
        %403 = vmatpush1.msra.mxu0 0.0
        %404 = vmatprep.subr.mxu0 0.0
        %405 = vmatpush1.msra.mxu0 0.0
        %406 = vmatprep.subr.mxu0 0.0
        %407 = vmatpush1.msra.mxu0 0.0
        %408 = vmatprep.subr.mxu0 0.0
        %409 = vmatpush1.msra.mxu0 0.0
        %410 = vmatprep.mubr.f32.mxu0 0.0
        %411 = vmatmul.mubr.f32.gmra.mrb[0].mxu0 %v326
        %v412 = vpop.f32.mrb[0].mxu0
        %v413 = vadd.f32 0.0, %v412
        %v414 = vpop.f32.mrb[0].mxu0
        %415 = vmatprep.mubr.f32.mxu0 0.0
        %416 = vmatmul.mubr.f32.gmra.mrb[0].mxu0 %v327
        %v417 = vpop.f32.mrb[0].mxu0
        %v418 = vadd.f32 0.0, %v417
        %v419 = vpop.f32.mrb[0].mxu0
        %420 = vmatprep.mubr.f32.mxu0 0.0
        %421 = vmatmul.mubr.f32.gmra.mrb[0].mxu0 %v328
        %v422 = vpop.f32.mrb[0].mxu0
        %v423 = vadd.f32 0.0, %v422
        %v424 = vpop.f32.mrb[0].mxu0
        %425 = vmatprep.mubr.f32.mxu0 0.0
        %426 = vmatmul.mubr.f32.gmra.mrb[0].mxu0 %v329
        %v427 = vpop.f32.mrb[0].mxu0
        %v428 = vadd.f32 0.0, %v427
        %v429 = vpop.f32.mrb[0].mxu0
        %430 = vdwg.mxu0
        %v431 = vld [vmem:[%s283] sm:$0xff]
        %v432 = vld [vmem:[%s283 + $0x8] sm:$0xff]
        %v433 = vld [vmem:[%s283 + $0x10] sm:$0xff]
        %v434 = vld [vmem:[%s283 + $0x18] sm:$0xff]
        %v435 = vld [vmem:[%s283 + $0x20] sm:$0xff]
        %v436 = vld [vmem:[%s283 + $0x28] sm:$0xff]
        %v437 = vld [vmem:[%s283 + $0x30] sm:$0xff]
        %v438 = vld [vmem:[%s283 + $0x38] sm:$0xff]
        %v439 = vld [vmem:[%s283 + $0x40] sm:$0xff]
        %v440 = vld [vmem:[%s283 + $0x48] sm:$0xff]
        %v441 = vld [vmem:[%s283 + $0x50] sm:$0xff]
        %v442 = vld [vmem:[%s283 + $0x58] sm:$0xff]
        %v443 = vld [vmem:[%s283 + $0x60] sm:$0xff]
        %v444 = vld [vmem:[%s283 + $0x68] sm:$0xff]
        %v445 = vld [vmem:[%s283 + $0x70] sm:$0xff]
        %v446 = vld [vmem:[%s283 + $0x78] sm:$0xff]
        %447 = vmatprep.subr.mxu0 0.0
        %448 = vmatpush1.msra.mxu0 %v431
        %449 = vmatprep.subr.mxu0 0.0
        %450 = vmatpush1.msra.mxu0 %v432
        %451 = vmatprep.subr.mxu0 0.0
        %452 = vmatpush1.msra.mxu0 %v433
        %453 = vmatprep.subr.mxu0 0.0
        %454 = vmatpush1.msra.mxu0 %v434
        %455 = vmatprep.subr.mxu0 0.0
        %456 = vmatpush1.msra.mxu0 %v435
        %457 = vmatprep.subr.mxu0 0.0
        %458 = vmatpush1.msra.mxu0 %v436
        %459 = vmatprep.subr.mxu0 0.0
        %460 = vmatpush1.msra.mxu0 %v437
        %461 = vmatprep.subr.mxu0 0.0
        %462 = vmatpush1.msra.mxu0 %v438
        %463 = vmatprep.subr.mxu0 0.0
        %464 = vmatpush1.msra.mxu0 %v439
        %465 = vmatprep.subr.mxu0 0.0
        %466 = vmatpush1.msra.mxu0 %v440
        %467 = vmatprep.subr.mxu0 0.0
        %468 = vmatpush1.msra.mxu0 %v441
        %469 = vmatprep.subr.mxu0 0.0
        %470 = vmatpush1.msra.mxu0 %v442
        %471 = vmatprep.subr.mxu0 0.0
        %472 = vmatpush1.msra.mxu0 %v443
        %473 = vmatprep.subr.mxu0 0.0
        %474 = vmatpush1.msra.mxu0 %v444
        %475 = vmatprep.subr.mxu0 0.0
        %476 = vmatpush1.msra.mxu0 %v445
        %477 = vmatprep.subr.mxu0 0.0
        %478 = vmatpush1.msra.mxu0 %v446
        %479 = vmatprep.subr.mxu0 0.0
        %480 = vmatpush1.msra.mxu0 0.0
        %481 = vmatprep.subr.mxu0 0.0
        %482 = vmatpush1.msra.mxu0 0.0
        %483 = vmatprep.subr.mxu0 0.0
        %484 = vmatpush1.msra.mxu0 0.0
        %485 = vmatprep.subr.mxu0 0.0
        %486 = vmatpush1.msra.mxu0 0.0
        %487 = vmatprep.subr.mxu0 0.0
        %488 = vmatpush1.msra.mxu0 0.0
        %489 = vmatprep.subr.mxu0 0.0
        %490 = vmatpush1.msra.mxu0 0.0
        %491 = vmatprep.subr.mxu0 0.0
        %492 = vmatpush1.msra.mxu0 0.0
        %493 = vmatprep.subr.mxu0 0.0
        %494 = vmatpush1.msra.mxu0 0.0
        %495 = vmatprep.subr.mxu0 0.0
        %496 = vmatpush1.msra.mxu0 0.0
        %497 = vmatprep.subr.mxu0 0.0
        %498 = vmatpush1.msra.mxu0 0.0
        %499 = vmatprep.subr.mxu0 0.0
        %500 = vmatpush1.msra.mxu0 0.0
        %501 = vmatprep.subr.mxu0 0.0
        %502 = vmatpush1.msra.mxu0 0.0
        %503 = vmatprep.subr.mxu0 0.0
        %504 = vmatpush1.msra.mxu0 0.0
        %505 = vmatprep.subr.mxu0 0.0
        %506 = vmatpush1.msra.mxu0 0.0
        %507 = vmatprep.subr.mxu0 0.0
        %508 = vmatpush1.msra.mxu0 0.0
        %509 = vmatprep.subr.mxu0 0.0
        %510 = vmatpush1.msra.mxu0 0.0
        %511 = vmatprep.mubr.f32.mxu0 0.0
        %512 = vmatmul.mubr.f32.gmra.mrb[0].mxu0 %v326
        %v513 = vpop.f32.mrb[0].mxu0
        %v514 = vadd.f32 0.0, %v513
        %v515 = vpop.f32.mrb[0].mxu0
        %516 = vmatprep.mubr.f32.mxu0 0.0
        %517 = vmatmul.mubr.f32.gmra.mrb[0].mxu0 %v327
        %v518 = vpop.f32.mrb[0].mxu0
        %v519 = vadd.f32 0.0, %v518
        %v520 = vpop.f32.mrb[0].mxu0
        %521 = vmatprep.mubr.f32.mxu0 0.0
        %522 = vmatmul.mubr.f32.gmra.mrb[0].mxu0 %v328
        %v523 = vpop.f32.mrb[0].mxu0
        %v524 = vadd.f32 0.0, %v523
        %v525 = vpop.f32.mrb[0].mxu0
        %526 = vmatprep.mubr.f32.mxu0 0.0
        %527 = vmatmul.mubr.f32.gmra.mrb[0].mxu0 %v329
        %v528 = vpop.f32.mrb[0].mxu0
        %v529 = vadd.f32 0.0, %v528
        %v530 = vpop.f32.mrb[0].mxu0
        %531 = vdwg.mxu0
        %v532 = vxor.u32 %v514, 2147483648
        %v533 = vxor.u32 %v519, 2147483648
        %v534 = vxor.u32 %v524, 2147483648
        %v535 = vxor.u32 %v529, 2147483648
        %v536 = vmul.f32 %v532, 1.442695
        %v537 = vpow.pop %v536
        %v538 = vmul.f32 %v533, 1.442695
        %v539 = vpow.pop %v538
        %v540 = vmul.f32 %v534, 1.442695
        %v541 = vpow.pop %v540
        %v542 = vmul.f32 %v535, 1.442695
        %v543 = vpow.pop %v542
        %v544 = vadd.f32 %v537, 1.0
        %v545 = vadd.f32 %v539, 1.0
        %v546 = vadd.f32 %v541, 1.0
        %v547 = vadd.f32 %v543, 1.0
        %v548 = vrcp.pop %v544
        %v549 = vmul.f32 1.0, %v548
        %v550 = vrcp.pop %v545
        %v551 = vmul.f32 1.0, %v550
        %v552 = vrcp.pop %v546
        %v553 = vmul.f32 1.0, %v552
        %v554 = vrcp.pop %v547
        %v555 = vmul.f32 1.0, %v554
        %v556 = vmul.f32 %v514, %v549
        %v557 = vmul.f32 %v519, %v551
        %v558 = vmul.f32 %v524, %v553
        %v559 = vmul.f32 %v529, %v555
        %v560 = vmul.f32 %v413, %v556
        %v561 = vmul.f32 %v418, %v557
        %v562 = vmul.f32 %v423, %v558
        %v563 = vmul.f32 %v428, %v559
        %v564 = vld [vmem:[%s292] sm:$0xff]
        %v565 = vld [vmem:[%s292 + $0x8] sm:$0xff]
        %v566 = vld [vmem:[%s292 + $0x10] sm:$0xff]
        %v567 = vld [vmem:[%s292 + $0x18] sm:$0xff]
        %v568 = vld [vmem:[%s292 + $0x20] sm:$0xff]
        %v569 = vld [vmem:[%s292 + $0x28] sm:$0xff]
        %v570 = vld [vmem:[%s292 + $0x30] sm:$0xff]
        %v571 = vld [vmem:[%s292 + $0x38] sm:$0xff]
        %v572 = vld [vmem:[%s292 + $0x40] sm:$0xff]
        %v573 = vld [vmem:[%s292 + $0x48] sm:$0xff]
        %v574 = vld [vmem:[%s292 + $0x50] sm:$0xff]
        %v575 = vld [vmem:[%s292 + $0x58] sm:$0xff]
        %v576 = vld [vmem:[%s292 + $0x60] sm:$0xff]
        %v577 = vld [vmem:[%s292 + $0x68] sm:$0xff]
        %v578 = vld [vmem:[%s292 + $0x70] sm:$0xff]
        %v579 = vld [vmem:[%s292 + $0x78] sm:$0xff]
        %580 = vmatprep.subr.mxu0 0.0
        %581 = vmatpush1.msra.mxu0 %v564
        %582 = vmatprep.subr.mxu0 0.0
        %583 = vmatpush1.msra.mxu0 %v565
        %584 = vmatprep.subr.mxu0 0.0
        %585 = vmatpush1.msra.mxu0 %v566
        %586 = vmatprep.subr.mxu0 0.0
        %587 = vmatpush1.msra.mxu0 %v567
        %588 = vmatprep.subr.mxu0 0.0
        %589 = vmatpush1.msra.mxu0 %v568
        %590 = vmatprep.subr.mxu0 0.0
        %591 = vmatpush1.msra.mxu0 %v569
        %592 = vmatprep.subr.mxu0 0.0
        %593 = vmatpush1.msra.mxu0 %v570
        %594 = vmatprep.subr.mxu0 0.0
        %595 = vmatpush1.msra.mxu0 %v571
        %596 = vmatprep.subr.mxu0 0.0
        %597 = vmatpush1.msra.mxu0 %v572
        %598 = vmatprep.subr.mxu0 0.0
        %599 = vmatpush1.msra.mxu0 %v573
        %600 = vmatprep.subr.mxu0 0.0
        %601 = vmatpush1.msra.mxu0 %v574
        %602 = vmatprep.subr.mxu0 0.0
        %603 = vmatpush1.msra.mxu0 %v575
        %604 = vmatprep.subr.mxu0 0.0
        %605 = vmatpush1.msra.mxu0 %v576
        %606 = vmatprep.subr.mxu0 0.0
        %607 = vmatpush1.msra.mxu0 %v577
        %608 = vmatprep.subr.mxu0 0.0
        %609 = vmatpush1.msra.mxu0 %v578
        %610 = vmatprep.subr.mxu0 0.0
        %611 = vmatpush1.msra.mxu0 %v579
        %612 = vmatprep.subr.mxu0 0.0
        %613 = vmatpush1.msra.mxu0 0.0
        %614 = vmatprep.subr.mxu0 0.0
        %615 = vmatpush1.msra.mxu0 0.0
        %616 = vmatprep.subr.mxu0 0.0
        %617 = vmatpush1.msra.mxu0 0.0
        %618 = vmatprep.subr.mxu0 0.0
        %619 = vmatpush1.msra.mxu0 0.0
        %620 = vmatprep.subr.mxu0 0.0
        %621 = vmatpush1.msra.mxu0 0.0
        %622 = vmatprep.subr.mxu0 0.0
        %623 = vmatpush1.msra.mxu0 0.0
        %624 = vmatprep.subr.mxu0 0.0
        %625 = vmatpush1.msra.mxu0 0.0
        %626 = vmatprep.subr.mxu0 0.0
        %627 = vmatpush1.msra.mxu0 0.0
        %628 = vmatprep.subr.mxu0 0.0
        %629 = vmatpush1.msra.mxu0 0.0
        %630 = vmatprep.subr.mxu0 0.0
        %631 = vmatpush1.msra.mxu0 0.0
        %632 = vmatprep.subr.mxu0 0.0
        %633 = vmatpush1.msra.mxu0 0.0
        %634 = vmatprep.subr.mxu0 0.0
        %635 = vmatpush1.msra.mxu0 0.0
        %636 = vmatprep.subr.mxu0 0.0
        %637 = vmatpush1.msra.mxu0 0.0
        %638 = vmatprep.subr.mxu0 0.0
        %639 = vmatpush1.msra.mxu0 0.0
        %640 = vmatprep.subr.mxu0 0.0
        %641 = vmatpush1.msra.mxu0 0.0
        %642 = vmatprep.subr.mxu0 0.0
        %643 = vmatpush1.msra.mxu0 0.0
        %644 = vmatprep.mubr.f32.mxu0 0.0
        %645 = vmatmul.mubr.f32.gmra.mrb[0].mxu0 %v560
        %v646 = vpop.f32.mrb[0].mxu0
        %v647 = vadd.f32 0.0, %v646
        %v648 = vpop.f32.mrb[0].mxu0
        %649 = vmatprep.mubr.f32.mxu0 0.0
        %650 = vmatmul.mubr.f32.gmra.mrb[0].mxu0 %v561
        %v651 = vpop.f32.mrb[0].mxu0
        %v652 = vadd.f32 0.0, %v651
        %v653 = vpop.f32.mrb[0].mxu0
        %654 = vmatprep.mubr.f32.mxu0 0.0
        %655 = vmatmul.mubr.f32.gmra.mrb[0].mxu0 %v562
        %v656 = vpop.f32.mrb[0].mxu0
        %v657 = vadd.f32 0.0, %v656
        %v658 = vpop.f32.mrb[0].mxu0
        %659 = vmatprep.mubr.f32.mxu0 0.0
        %660 = vmatmul.mubr.f32.gmra.mrb[0].mxu0 %v563
        %v661 = vpop.f32.mrb[0].mxu0
        %v662 = vadd.f32 0.0, %v661
        %v663 = vpop.f32.mrb[0].mxu0
        %664 = vdwg.mxu0
        %p665 = scmp.eq.s32.totalorder %s28, 0
        // Predicated region
        $region53: #{tpu_custom_call.1} parent=35 // pred_check
          %p666 = pneg %p665
        $region54: #{tpu_custom_call.1} parent=35 // pred_check_branch
          %668 = sbr.rel (%p666) target = $region56
        $region55: #{tpu_custom_call.1} parent=35 // pred_region
          %669 = vst [vmem:[#allocation2] sm:$0xff] %v647
          %670 = vst [vmem:[#allocation2 + $0x8] sm:$0xff] %v652
          %671 = vst [vmem:[#allocation2 + $0x10] sm:$0xff] %v657
          %672 = vst [vmem:[#allocation2 + $0x18] sm:$0xff] %v662
        $region56: #{tpu_custom_call.1} parent=35 // pred_fallthru
          _
        %p673 = scmp.gt.s32.totalorder %s28, 0
        // Predicated region
        $region57: #{tpu_custom_call.1} parent=35 // pred_check
          %p674 = pneg %p673
        $region58: #{tpu_custom_call.1} parent=35 // pred_check_branch
          %676 = sbr.rel (%p674) target = $region60
        $region59: #{tpu_custom_call.1} parent=35 // pred_region
          %v677 = vld [vmem:[#allocation2] sm:$0xff]
          %v678 = vld [vmem:[#allocation2 + $0x8] sm:$0xff]
          %v679 = vld [vmem:[#allocation2 + $0x10] sm:$0xff]
          %v680 = vld [vmem:[#allocation2 + $0x18] sm:$0xff]
          %v681 = vadd.f32 %v677, %v647
          %v682 = vadd.f32 %v678, %v652
          %v683 = vadd.f32 %v679, %v657
          %v684 = vadd.f32 %v680, %v662
          %685 = vst [vmem:[#allocation2] sm:$0xff] %v681
          %686 = vst [vmem:[#allocation2 + $0x8] sm:$0xff] %v682
          %687 = vst [vmem:[#allocation2 + $0x10] sm:$0xff] %v683
          %688 = vst [vmem:[#allocation2 + $0x18] sm:$0xff] %v684
        $region60: #{tpu_custom_call.1} parent=35 // pred_fallthru
          _
        %p689 = scmp.eq.s32.totalorder %s28, 1
        // Predicated region
        $region61: #{tpu_custom_call.1} parent=35 // pred_check
          %p690 = pneg %p689
        $region62: #{tpu_custom_call.1} parent=35 // pred_check_branch
          %692 = sbr.rel (%p690) target = $region64
        $region63: #{tpu_custom_call.1} parent=35 // pred_region
          %v693 = vld [vmem:[#allocation2] sm:$0xff]
          %v694 = vld [vmem:[#allocation2 + $0x8] sm:$0xff]
          %v695 = vld [vmem:[#allocation2 + $0x10] sm:$0xff]
          %v696 = vld [vmem:[#allocation2 + $0x18] sm:$0xff]
          %697 = vst [vmem:[#allocation11] sm:$0xff] %v693
          %698 = vst [vmem:[#allocation11 + $0x8] sm:$0xff] %v694
          %699 = vst [vmem:[#allocation11 + $0x10] sm:$0xff] %v695
          %700 = vst [vmem:[#allocation11 + $0x18] sm:$0xff] %v696
        $region64: #{tpu_custom_call.1} parent=35 // pred_fallthru
          _
        // Predicated region
        $region65: #{tpu_custom_call.1} parent=35 // pred_check
          %p701 = pneg %p159
        $region66: #{tpu_custom_call.1} parent=35 // pred_check_branch
          %703 = sbr.rel (%p701) target = $region68
        $region67: #{tpu_custom_call.1} parent=35 // pred_region
          %s704 = smul.u32 4, %s27
          %s706 = ssub.s32 512, 512
          %707 = vsyncadd [#allocation5], %s706
          %s708 = smul.addr %s704, 128
          %s709 = scalar_lea.hbm %s4, %s708
          %s710 = sshll.u32 [#allocation11], 4
          %s711 = int_to_ptr.vmem [resolvable:$true] %s710
          %716 = dma.vmem_to_hbm [thread:$0]  %s711, 512, %s709, [#allocation5], 128, 128, 8
        $region68: #{tpu_custom_call.1} parent=35 // pred_fallthru
          _
        // Predicated region
        $region69: #{tpu_custom_call.1} parent=35 // pred_check
          %p717 = pneg %p159
        $region70: #{tpu_custom_call.1} parent=35 // pred_check_branch
          %719 = sbr.rel (%p717) target = $region72
        $region71: #{tpu_custom_call.1} parent=35 // pred_region
          %720 = dma.done [#allocation5], 512
        $region72: #{tpu_custom_call.1} parent=35 // pred_fallthru
          _
      $region36: #{tpu_custom_call.1} parent=5 // pred_fallthru
        _
      %p721 = scmp.le.s32.totalorder 2, %s18
      // Predicated region
      $region73: #{tpu_custom_call.1} parent=5 // pred_check
        %p722 = pneg %p721
      $region74: #{tpu_custom_call.1} parent=5 // pred_check_branch
        %724 = sbr.rel (%p722) target = $region76
      $region75: #{tpu_custom_call.1} parent=5 // pred_region
        %s725 = ssub.s32 %s18, 2
      $region76: #{tpu_custom_call.1} parent=5 // pred_fallthru
        _
    $region6: #{tpu_custom_call.1} parent=1 // loop_footer
      %s22 = sadd.s32 1, %s18
    $region7: #{tpu_custom_call.1} parent=1 // loop_footer_branch
      %17 = sbr.rel target = $region3
    $region8: #{tpu_custom_call.1} parent=1 // loop_exit
      _
    %726 = vsyncpa [#allocation4], 1
    %s727 = scalar_lea.sflag [#allocation4], 1
    %728 = vsyncpa %s727, 1
    %729 = vsyncpa [#allocation7], 1
    %s730 = scalar_lea.sflag [#allocation7], 1
    %731 = vsyncpa %s730, 1
    %732 = vsyncpa [#allocation10], 1
    %s733 = scalar_lea.sflag [#allocation10], 1
    %734 = vsyncpa %s733, 1
    %735 = vsyncpa [#allocation5], 1
    %s736 = scalar_lea.sflag [#allocation5], 1
    %737 = vsyncpa %s736, 1

</llo_original>
